<compile_context>
chip_gen: v5e
topology: v5e:2x2
jax: 0.10.0
libtpu: 0.0.40
codegen_flags: <defaults>
</compile_context>

<pallas_src>
import functools

import jax
import jax.numpy as jnp
from jax.experimental import pallas as pl
from jax.experimental.pallas import tpu as pltpu

LANES = 128
SUBLANES = 8


def _round_up(x, m):
    return (x + m - 1) // m * m


def _vmem_limit_bytes():
    """Chip-aware scoped-VMEM limit: ~75% of physical, 16 MiB headroom."""
    try:
        cap = pltpu.get_tpu_info().vmem_capacity_bytes
    except Exception:  # pragma: no cover - conservative (v7x-safe) fallback
        cap = 64 * 1024 * 1024
    limit = min(int(cap * 0.75), cap - 16 * 1024 * 1024)
    return max(limit, 32 * 1024 * 1024)


def _choose_tiles(batch, seq, hidden, itemsize, budget_bytes):
    """Pick (tile_b, tile_s) so the double-buffered h tile fits the budget.

    tile_s is a multiple of 8 that divides seq (or seq itself) so the seq
    reduction never reads ragged garbage; tile_b is a multiple of 8 capped at
    256, or exactly `batch` when a single batch tile suffices.
    """
    b_full = _round_up(batch, SUBLANES)
    tile_b = min(256, b_full)

    s_cands = [d for d in range(SUBLANES, seq + 1, SUBLANES) if seq % d == 0] or [seq]

    def fits(tb, ts):
        return 2 * tb * ts * hidden * itemsize <= budget_bytes  # double-buffered h tile

    while tile_b > SUBLANES and not fits(tile_b, s_cands[0]):
        tile_b -= SUBLANES
    tile_s = s_cands[0]
    for ts in s_cands:
        if fits(tile_b, ts):
            tile_s = ts

    if tile_b >= b_full:
        if b_full >= 2 * SUBLANES:
            # Split a single batch tile in two so v7x's second TensorCore gets work.
            tile_b = _round_up((b_full + 1) // 2, SUBLANES)
        else:
            # One tile covering exactly the batch: no over-read, no padding.
            tile_b = batch
    return tile_b, tile_s


def clf_head_kernel(h_ref, w1t_ref, b1_ref, w2t_ref, b2_ref, logits_ref, acc_ref,
                    *, inv_seq_len):
    """One (batch-tile, seq-tile) grid step.

    h_ref      : [TB, TS, H] native dtype  last_hidden_state tile (pipelined)
    w1t_ref    : [H, H]      bf16          hidden_layer.weight^T   (resident)
    b1_ref     : [1, H]      f32           hidden_layer.bias
    w2t_ref    : [H, Cp]     bf16          classifier.weight^T, class dim padded to 128
    b2_ref     : [1, Cp]     f32           classifier.bias (zero padded)
    logits_ref : [TB, Cp]    f32           lane-dense logits output (written on last seq step)
    acc_ref    : [TB, H]     f32 scratch   running seq-sum accumulator
    """
    j = pl.program_id(1)

    @pl.when(j == 0)
    def _():
        acc_ref[...] = jnp.zeros_like(acc_ref)

    # h = torch.mean(h.last_hidden_state, 1): f32-accumulated partial sum over
    # this seq slab (no full-tile f32 materialization).
    acc_ref[...] += jnp.sum(h_ref[...], axis=1, dtype=jnp.float32)

    @pl.when(j == pl.num_programs(1) - 1)
    def _():
        pooled = (acc_ref[...] * inv_seq_len).astype(jnp.bfloat16)            # [TB, H]

        # h = self.hidden_layer(h)   (bf16 MXU operands, f32 accumulation)
        x = jnp.dot(pooled, w1t_ref[...],
                    preferred_element_type=jnp.float32) + b1_ref[...]         # [TB, H]

        # h = self.dropout(h)
        # TODO(synk): nn.Dropout(p=0.3) is identity in eval mode; train-mode
        # random masking is intentionally not reproduced.

        # logits = self.classifier(h)  -> lane-dense class-padded output
        logits_ref[...] = jnp.dot(x.astype(jnp.bfloat16), w2t_ref[...],
                                  preferred_element_type=jnp.float32) + b2_ref[...]


def pack_params(params, num_labels):
    """One-time packing (call once, not per forward): transpose to [in, out],
    cast MXU operands to bf16, pad the class dim to a lane-dense multiple of 128."""
    hidden = params["hidden_w"].shape[0]
    c_pad = _round_up(max(num_labels, 1), LANES)
    w1t = params["hidden_w"].T.astype(jnp.bfloat16)                          # [H, H]
    b1 = params["hidden_b"].reshape(1, hidden).astype(jnp.float32)           # [1, H]
    w2t = jnp.zeros((hidden, c_pad), jnp.bfloat16).at[:, :num_labels].set(
        params["classifier_w"].T.astype(jnp.bfloat16))                       # [H, Cp]
    b2 = jnp.zeros((1, c_pad), jnp.float32).at[:, :num_labels].set(
        params["classifier_b"].reshape(1, num_labels).astype(jnp.float32))   # [1, Cp]
    return {"w1t": w1t, "b1": b1, "w2t": w2t, "b2": b2,
            "hidden": hidden, "num_labels": num_labels, "c_pad": c_pad}


def clf_model_forward(last_hidden_state, packed, labels, loss_weights=None):
    """Wrapper: tiles (batch, seq), invokes the Pallas kernel, finalizes the CE loss."""
    B, S, H = last_hidden_state.shape
    C = packed["num_labels"]
    Cp = packed["c_pad"]
    assert H == packed["hidden"]

    limit = _vmem_limit_bytes()
    # Reserve VMEM for the (possibly double-buffered) resident operands, the
    # pipelined logits output and the f32 accumulator; the rest feeds the h tile.
    resident = 2 * (2 * H * H + 4 * H + 2 * H * Cp + 4 * Cp) + 2 * 256 * Cp * 4 + 256 * H * 4
    budget = max(2 * 1024 * 1024, limit // 2 - resident)
    itemsize = jnp.dtype(last_hidden_state.dtype).itemsize
    tile_b, tile_s = _choose_tiles(B, S, H, itemsize, budget)
    n_bt = pl.cdiv(B, tile_b)
    n_st = pl.cdiv(S, tile_s)

    kernel = functools.partial(clf_head_kernel, inv_seq_len=1.0 / S)

    logits_pad = pl.pallas_call(
        kernel,
        out_shape=jax.ShapeDtypeStruct((n_bt * tile_b, Cp), jnp.float32),
        grid=(n_bt, n_st),
        in_specs=[
            pl.BlockSpec((tile_b, tile_s, H), lambda i, j: (i, j, 0)),  # hidden states (pipelined)
            pl.BlockSpec((H, H), lambda i, j: (0, 0)),                  # W1^T  (resident)
            pl.BlockSpec((1, H), lambda i, j: (0, 0)),                  # b1    (resident)
            pl.BlockSpec((H, Cp), lambda i, j: (0, 0)),                 # W2^T  (resident)
            pl.BlockSpec((1, Cp), lambda i, j: (0, 0)),                 # b2    (resident)
        ],
        out_specs=pl.BlockSpec((tile_b, Cp), lambda i, j: (i, 0)),      # lane-dense logits
        scratch_shapes=[pltpu.VMEM((tile_b, H), jnp.float32)],          # seq-sum accumulator
        compiler_params=pltpu.CompilerParams(
            dimension_semantics=("parallel", "arbitrary"),              # batch across TCs, seq reduce
            vmem_limit_bytes=limit,
        ),
    )(last_hidden_state, packed["w1t"], packed["b1"], packed["w2t"], packed["b2"])

    logits = logits_pad[:B, :C]

    # loss_fn: nn.CrossEntropyLoss(weight=loss_weights) over tiny [B, C] logits
    # (finalized here per review; the heavy [B,S,H] work stays in the kernel).
    labels_flat = labels.reshape(-1)
    logp = jax.nn.log_softmax(logits.astype(jnp.float32), axis=-1)
    nll = -jnp.take_along_axis(logp, labels_flat[:, None], axis=-1)[:, 0]
    if loss_weights is None:
        loss = jnp.mean(nll)
    else:
        w = loss_weights.astype(jnp.float32)[labels_flat]
        loss = jnp.sum(w * nll) / jnp.sum(w)   # NaN if all weights zero (matches PyTorch)
    return logits, loss


def init_params(key, hidden_size, num_labels):
    """Deterministic parameter init mirroring the module's __init__ shapes."""
    k1, k2, k3 = jax.random.split(key, 3)
    bound_h = 1.0 / jnp.sqrt(hidden_size)
    hidden_w = jax.random.uniform(k1, (hidden_size, hidden_size),
                                  jnp.float32, -bound_h, bound_h)
    hidden_b = jax.random.uniform(k2, (hidden_size,),
                                  jnp.float32, -bound_h, bound_h)
    bound_x = jnp.sqrt(6.0 / (hidden_size + num_labels))   # xavier_uniform_
    classifier_w = jax.random.uniform(k3, (num_labels, hidden_size),
                                      jnp.float32, -bound_x, bound_x)
    classifier_b = jnp.zeros((num_labels,), jnp.float32)
    return {"hidden_w": hidden_w, "hidden_b": hidden_b,
            "classifier_w": classifier_w, "classifier_b": classifier_b}


def reference_forward(last_hidden_state, params, labels, loss_weights=None):
    """Pure-JAX reference mirroring the kernel's bf16-operand / f32-accumulate math."""
    f32 = jnp.float32
    pooled = jnp.mean(last_hidden_state.astype(f32), axis=1)
    w1 = params["hidden_w"].astype(jnp.bfloat16).astype(f32)
    w2 = params["classifier_w"].astype(jnp.bfloat16).astype(f32)
    x = pooled.astype(jnp.bfloat16).astype(f32) @ w1.T + params["hidden_b"]
    logits = x.astype(jnp.bfloat16).astype(f32) @ w2.T + params["classifier_b"]
    logp = jax.nn.log_softmax(logits, axis=-1)
    nll = -jnp.take_along_axis(logp, labels[:, None], axis=-1)[:, 0]
    if loss_weights is None:
        loss = jnp.mean(nll)
    else:
        w = loss_weights[labels]
        loss = jnp.sum(w * nll) / jnp.sum(w)
    return logits, loss


if __name__ == "__main__":
    # Small, self-consistent shapes: batch=8, seq=8, hidden=32, num_labels=4.
    B, S, H, C, VOCAB = 8, 8, 32, 4, 50

    key = jax.random.PRNGKey(0)
    k_emb, k_ids, k_lab, k_par = jax.random.split(key, 4)

    # Frozen "pretrained model" stand-in: deterministic embedding table.
    # TODO(synk): the real AutoModel transformer backbone is frozen and cannot be
    # loaded here; this stand-in only provides last_hidden_state with the right shape.
    embed_table = jax.random.normal(k_emb, (VOCAB, H), jnp.float32) * 0.02
    input_ids = jax.random.randint(k_ids, (B, S), 0, VOCAB, jnp.int32)
    attention_mask = jnp.ones((B, S), jnp.int32)   # API parity; stand-in ignores it
    labels = jax.random.randint(k_lab, (B,), 0, C, jnp.int32)

    # last_hidden_state ~ pretrained_model(input_ids, attention_mask).last_hidden_state
    last_hidden_state = embed_table[input_ids]     # [B, S, H], native f32

    params = init_params(k_par, H, C)
    packed = pack_params(params, C)                # one-time packing (no per-call transposes)

    # Unweighted loss.
    logits, loss = clf_model_forward(last_hidden_state, packed, labels)
    jax.block_until_ready((logits, loss))
    ref_logits, ref_loss = reference_forward(last_hidden_state, params, labels)
    assert jnp.allclose(logits, ref_logits, atol=1e-4, rtol=1e-3), \
        float(jnp.max(jnp.abs(logits - ref_logits)))
    assert jnp.allclose(loss, ref_loss, atol=1e-4, rtol=1e-3), (float(loss), float(ref_loss))

    # Class-weighted loss.
    lw_vec = jnp.array([1.0, 2.0, 0.5, 1.5], jnp.float32)
    logits_w, loss_w = clf_model_forward(last_hidden_state, packed, labels, lw_vec)
    jax.block_until_ready((logits_w, loss_w))
    _, ref_loss_w = reference_forward(last_hidden_state, params, labels, lw_vec)
    assert jnp.allclose(loss_w, ref_loss_w, atol=1e-4, rtol=1e-3), \
        (float(loss_w), float(ref_loss_w))

    print("KERNEL_OK")
</pallas_src>

<mosaic_0001>
module attributes {stable_mosaic.version = 11 : i64} {
  func.func @clf_head_kernel(%arg0: i32, %arg1: i32, %arg2: memref<8x8x32xf32, #tpu.memory_space<vmem>>, %arg3: memref<32x32xbf16, #tpu.memory_space<vmem>>, %arg4: memref<1x32xf32, #tpu.memory_space<vmem>>, %arg5: memref<32x128xbf16, #tpu.memory_space<vmem>>, %arg6: memref<1x128xf32, #tpu.memory_space<vmem>>, %arg7: memref<8x128xf32, #tpu.memory_space<vmem>>, %arg8: memref<8x32xf32, #tpu.memory_space<vmem>>) attributes {dimension_semantics = [#tpu.dimension_semantics<parallel>, #tpu.dimension_semantics<arbitrary>], iteration_bounds = array<i64: 1, 1>, scalar_prefetch = 0 : i64, scratch_operands = 1 : i64, tpu.core_type = #tpu.core_type<tc>, window_params = [{transform_indices = @transform_0, window_bounds = array<i64: 8, 8, 32>}, {pipeline_mode = #tpu.pipeline_mode<synchronous>, transform_indices = @transform_1, window_bounds = array<i64: 32, 32>}, {pipeline_mode = #tpu.pipeline_mode<synchronous>, transform_indices = @transform_2, window_bounds = array<i64: 1, 32>}, {pipeline_mode = #tpu.pipeline_mode<synchronous>, transform_indices = @transform_3, window_bounds = array<i64: 32, 128>}, {pipeline_mode = #tpu.pipeline_mode<synchronous>, transform_indices = @transform_4, window_bounds = array<i64: 1, 128>}, {transform_indices = @transform_5, window_bounds = array<i64: 8, 128>}]} {
    %c0_i32 = arith.constant 0 : i32
    %0 = arith.cmpi eq, %arg1, %c0_i32 : i32
    %1 = arith.extui %0 : i1 to i32
    %c0_i32_0 = arith.constant 0 : i32
    %2 = arith.cmpi ne, %1, %c0_i32_0 : i32
    scf.if %2 {
      %cst_9 = arith.constant 0.000000e+00 : f32
      %11 = vector.broadcast %cst_9 : f32 to vector<8x32xf32>
      %c0_10 = arith.constant 0 : index
      %c0_11 = arith.constant 0 : index
      %12 = vector.load %arg8[%c0_10, %c0_11] : memref<8x32xf32, #tpu.memory_space<vmem>>, vector<8x32xf32>
      tpu.vector_store %arg8[%c0_10, %c0_11], %11 {strides = array<i32>} : memref<8x32xf32, #tpu.memory_space<vmem>>, vector<8x32xf32>,
    } else {
    }
    %c0 = arith.constant 0 : index
    %c0_1 = arith.constant 0 : index
    %3 = vector.load %arg8[%c0, %c0_1] : memref<8x32xf32, #tpu.memory_space<vmem>>, vector<8x32xf32>
    %c0_2 = arith.constant 0 : index
    %c0_3 = arith.constant 0 : index
    %c0_4 = arith.constant 0 : index
    %4 = vector.load %arg2[%c0_2, %c0_3, %c0_4] : memref<8x8x32xf32, #tpu.memory_space<vmem>>, vector<8x8x32xf32>
    %cst = arith.constant dense<0.000000e+00> : vector<8x32xf32>
    %5 = vector.multi_reduction <add>, %4, %cst [1] : vector<8x8x32xf32> to vector<8x32xf32>
    %6 = arith.addf %3, %5 : vector<8x32xf32>
    %c0_5 = arith.constant 0 : index
    %c0_6 = arith.constant 0 : index
    %7 = vector.load %arg8[%c0_5, %c0_6] : memref<8x32xf32, #tpu.memory_space<vmem>>, vector<8x32xf32>
    tpu.vector_store %arg8[%c0_5, %c0_6], %6 {strides = array<i32>} : memref<8x32xf32, #tpu.memory_space<vmem>>, vector<8x32xf32>,
    %c0_i32_7 = arith.constant 0 : i32
    %8 = arith.cmpi eq, %arg1, %c0_i32_7 : i32
    %9 = arith.extui %8 : i1 to i32
    %c0_i32_8 = arith.constant 0 : i32
    %10 = arith.cmpi ne, %9, %c0_i32_8 : i32
    scf.if %10 {
      %c0_9 = arith.constant 0 : index
      %c0_10 = arith.constant 0 : index
      %11 = vector.load %arg8[%c0_9, %c0_10] : memref<8x32xf32, #tpu.memory_space<vmem>>, vector<8x32xf32>
      %cst_11 = arith.constant 1.250000e-01 : f32
      %12 = vector.broadcast %cst_11 : f32 to vector<8x32xf32>
      %13 = arith.mulf %11, %12 : vector<8x32xf32>
      %14 = arith.truncf %13 : vector<8x32xf32> to vector<8x32xbf16>
      %c0_12 = arith.constant 0 : index
      %c0_13 = arith.constant 0 : index
      %15 = vector.load %arg3[%c0_12, %c0_13] : memref<32x32xbf16, #tpu.memory_space<vmem>>, vector<32x32xbf16>
      %cst_14 = arith.constant dense<0.000000e+00> : vector<8x32xf32>
      %16 = tpu.matmul %14, %15, %cst_14 {dimension_numbers = #tpu.dot_dimension_numbers<[1], [0], [0], [1], [0, 0, 1, 1], [], []>} : vector<8x32xbf16>, vector<32x32xbf16>, vector<8x32xf32> -> vector<8x32xf32>
      %c0_15 = arith.constant 0 : index
      %c0_16 = arith.constant 0 : index
      %17 = vector.load %arg4[%c0_15, %c0_16] : memref<1x32xf32, #tpu.memory_space<vmem>>, vector<1x32xf32>
      %18 = vector.broadcast %17 : vector<1x32xf32> to vector<8x32xf32>
      %19 = arith.addf %16, %18 : vector<8x32xf32>
      %20 = arith.truncf %19 : vector<8x32xf32> to vector<8x32xbf16>
      %c0_17 = arith.constant 0 : index
      %c0_18 = arith.constant 0 : index
      %21 = vector.load %arg5[%c0_17, %c0_18] : memref<32x128xbf16, #tpu.memory_space<vmem>>, vector<32x128xbf16>
      %cst_19 = arith.constant dense<0.000000e+00> : vector<8x128xf32>
      %22 = tpu.matmul %20, %21, %cst_19 {dimension_numbers = #tpu.dot_dimension_numbers<[1], [0], [0], [1], [0, 0, 1, 1], [], []>} : vector<8x32xbf16>, vector<32x128xbf16>, vector<8x128xf32> -> vector<8x128xf32>
      %c0_20 = arith.constant 0 : index
      %c0_21 = arith.constant 0 : index
      %23 = vector.load %arg6[%c0_20, %c0_21] : memref<1x128xf32, #tpu.memory_space<vmem>>, vector<1x128xf32>
      %24 = vector.broadcast %23 : vector<1x128xf32> to vector<8x128xf32>
      %25 = arith.addf %22, %24 : vector<8x128xf32>
      %c0_22 = arith.constant 0 : index
      %c0_23 = arith.constant 0 : index
      %26 = vector.load %arg7[%c0_22, %c0_23] : memref<8x128xf32, #tpu.memory_space<vmem>>, vector<8x128xf32>
      tpu.vector_store %arg7[%c0_22, %c0_23], %25 {strides = array<i32>} : memref<8x128xf32, #tpu.memory_space<vmem>>, vector<8x128xf32>,
    } else {
    }
    return
  }
  func.func @transform_0(%arg0: i32, %arg1: i32) -> (i32, i32, i32) {
    %c0_i32 = arith.constant 0 : i32
    %c0_i32_0 = arith.constant 0 : i32
    return %arg0, %arg1, %c0_i32 : i32, i32, i32
  }
  func.func @transform_1(%arg0: i32, %arg1: i32) -> (i32, i32) {
    %c0_i32 = arith.constant 0 : i32
    %c0_i32_0 = arith.constant 0 : i32
    %c0_i32_1 = arith.constant 0 : i32
    return %c0_i32, %c0_i32_0 : i32, i32
  }
  func.func @transform_2(%arg0: i32, %arg1: i32) -> (i32, i32) {
    %c0_i32 = arith.constant 0 : i32
    %c0_i32_0 = arith.constant 0 : i32
    %c0_i32_1 = arith.constant 0 : i32
    return %c0_i32, %c0_i32_0 : i32, i32
  }
  func.func @transform_3(%arg0: i32, %arg1: i32) -> (i32, i32) {
    %c0_i32 = arith.constant 0 : i32
    %c0_i32_0 = arith.constant 0 : i32
    %c0_i32_1 = arith.constant 0 : i32
    return %c0_i32, %c0_i32_0 : i32, i32
  }
  func.func @transform_4(%arg0: i32, %arg1: i32) -> (i32, i32) {
    %c0_i32 = arith.constant 0 : i32
    %c0_i32_0 = arith.constant 0 : i32
    %c0_i32_1 = arith.constant 0 : i32
    return %c0_i32, %c0_i32_0 : i32, i32
  }
  func.func @transform_5(%arg0: i32, %arg1: i32) -> (i32, i32) {
    %c0_i32 = arith.constant 0 : i32
    %c0_i32_0 = arith.constant 0 : i32
    return %arg0, %c0_i32 : i32, i32
  }
}

</mosaic_0001>

<llo_original>
// kernel: tpu_custom_call.1
$region0: #{tpu_custom_call.1}
  #allocation0 [shape = 'u32[]', space=smem, size = 0x4, offset = 0x4, fixed_abs, tag = 'smem constant byte address 0x4 - core index']
  #allocation1 [shape = 'u32[72,128]{1,0:T(1,128)}', space=vmem, size = 0x9000, scoped, tag = 'internal scratch']
  #allocation2 [shape = 'f32[8,32]{1,0:T(8,128)}', space=vmem, size = 0x1000, scoped, tag = 'scratch operand']
  %s0 = inlined_call_operand.hbm [shape: f32[8,8,32], index: 0, kind: input, shape index: {}]
  %s1 = inlined_call_operand.hbm [shape: bf16[32,32], index: 1, kind: input, shape index: {}]
  %s2 = inlined_call_operand.vmem [shape: f32[1,32], index: 2, kind: input, shape index: {}]
  %s3 = inlined_call_operand.hbm [shape: bf16[32,128], index: 3, kind: input, shape index: {}]
  %s4 = inlined_call_operand.vmem [shape: f32[1,128], index: 4, kind: input, shape index: {}]
  %s5 = inlined_call_operand.hbm [shape: f32[8,128], index: 5, kind: output, shape index: {}]
  %s6 = sld [smem:[#allocation0]]
  $region50: #{tpu_custom_call.1} parent=0
    _
  %s8 = ssub.s32 1, %s6
  %s9 = scalar_select 0, %s8, %s6
  $region1: #{tpu_custom_call.1} parent=0
    #allocation3 [shape = 'u8[32768]{0}', space=vmem, size = 0x8000, scoped, tag = 'input window, operand 0, single buffered']
    #allocation4 [shape = 's32[1]{0}', space=sflag, size = 0x4, scoped, tag = 'scoped memory for tpu_custom_call.1']
    #allocation5 [shape = 's32[1]{0}', space=sflag, size = 0x4, scoped, tag = 'scoped memory for tpu_custom_call.1']
    #allocation6 [shape = 'u8[8192]{0}', space=vmem, size = 0x2000, scoped, tag = 'input window, operand 1, single buffered']
    #allocation7 [shape = 's32[1]{0}', space=sflag, size = 0x4, scoped, tag = 'scoped memory for tpu_custom_call.1']
    #allocation8 [shape = 'u8[8192]{0}', space=vmem, size = 0x2000, scoped, tag = 'input window, operand 3, single buffered']
    #allocation9 [shape = 'u8[4096]{0}', space=vmem, size = 0x1000, scoped, tag = 'output window, operand 0, single buffered']
    %10 = vsyncpa [#allocation4], 0
    %11 = vsyncpa [#allocation7], 0
    %12 = vsyncpa [#allocation5], 0
    // Predicated region
    $region2: #{tpu_custom_call.1} parent=1 // pred_check
      _
    $region3: #{tpu_custom_call.1} parent=1 // pred_check_branch
      %14 = sbr.rel (0) target = $region5
    $region4: #{tpu_custom_call.1} parent=1 // pred_region
      %16 = vsyncadd [#allocation4], 0
      %s17 = sshll.u32 %s0, 4
      %s18 = int_to_ptr.hbm [resolvable:$true] %s17
      %s19 = sshll.u32 [#allocation3], 4
      %s20 = int_to_ptr.vmem [resolvable:$true] %s19
      %25 = dma.hbm_to_vmem [thread:$0]  %s18, 1024, %s20, [#allocation4], 128, 128, 8
    $region5: #{tpu_custom_call.1} parent=1 // pred_fallthru
      _
    // Predicated region
    $region6: #{tpu_custom_call.1} parent=1 // pred_check
      _
    $region7: #{tpu_custom_call.1} parent=1 // pred_check_branch
      %27 = sbr.rel (0) target = $region9
    $region8: #{tpu_custom_call.1} parent=1 // pred_region
      %29 = vsyncadd [#allocation7], 0
      %s30 = sshll.u32 %s1, 4
      %s31 = int_to_ptr.hbm [resolvable:$true] %s30
      %s32 = sshll.u32 [#allocation6], 4
      %s33 = int_to_ptr.vmem [resolvable:$true] %s32
      %38 = dma.hbm_to_vmem [thread:$0]  %s31, 256, %s33, [#allocation7], 64, 64, 4
    $region9: #{tpu_custom_call.1} parent=1 // pred_fallthru
      _
    // Predicated region
    $region10: #{tpu_custom_call.1} parent=1 // pred_check
      _
    $region11: #{tpu_custom_call.1} parent=1 // pred_check_branch
      %40 = sbr.rel (0) target = $region13
    $region12: #{tpu_custom_call.1} parent=1 // pred_region
      _
    $region13: #{tpu_custom_call.1} parent=1 // pred_fallthru
      _
    // Predicated region
    $region14: #{tpu_custom_call.1} parent=1 // pred_check
      _
    $region15: #{tpu_custom_call.1} parent=1 // pred_check_branch
      %42 = sbr.rel (0) target = $region17
    $region16: #{tpu_custom_call.1} parent=1 // pred_region
      %44 = vsyncadd [#allocation7], 0
      %s45 = sshll.u32 %s3, 4
      %s46 = int_to_ptr.hbm [resolvable:$true] %s45
      %s47 = sshll.u32 [#allocation8], 4
      %s48 = int_to_ptr.vmem [resolvable:$true] %s47
      %53 = dma.hbm_to_vmem [thread:$0]  %s46, 256, %s48, [#allocation7], 64, 64, 4
    $region17: #{tpu_custom_call.1} parent=1 // pred_fallthru
      _
    // Predicated region
    $region18: #{tpu_custom_call.1} parent=1 // pred_check
      _
    $region19: #{tpu_custom_call.1} parent=1 // pred_check_branch
      %55 = sbr.rel (0) target = $region21
    $region20: #{tpu_custom_call.1} parent=1 // pred_region
      _
    $region21: #{tpu_custom_call.1} parent=1 // pred_fallthru
      _
    // Predicated region
    $region22: #{tpu_custom_call.1} parent=1 // pred_check
      _
    $region23: #{tpu_custom_call.1} parent=1 // pred_check_branch
      %57 = sbr.rel (0) target = $region25
    $region24: #{tpu_custom_call.1} parent=1 // pred_region
      %59 = dma.done [#allocation4], 1024
    $region25: #{tpu_custom_call.1} parent=1 // pred_fallthru
      _
    // Predicated region
    $region26: #{tpu_custom_call.1} parent=1 // pred_check
      _
    $region27: #{tpu_custom_call.1} parent=1 // pred_check_branch
      %61 = sbr.rel (0) target = $region29
    $region28: #{tpu_custom_call.1} parent=1 // pred_region
      %63 = dma.done [#allocation7], 256
    $region29: #{tpu_custom_call.1} parent=1 // pred_fallthru
      _
    // Predicated region
    $region30: #{tpu_custom_call.1} parent=1 // pred_check
      _
    $region31: #{tpu_custom_call.1} parent=1 // pred_check_branch
      %65 = sbr.rel (0) target = $region33
    $region32: #{tpu_custom_call.1} parent=1 // pred_region
      %67 = dma.done [#allocation7], 256
    $region33: #{tpu_custom_call.1} parent=1 // pred_fallthru
      _
    %p69 = scmp.eq.s32.totalorder 0, 0
    // Predicated region
    $region34: #{tpu_custom_call.1} parent=1 // pred_check
      %p70 = pneg %p69
    $region35: #{tpu_custom_call.1} parent=1 // pred_check_branch
      %72 = sbr.rel (%p70) target = $region37
    $region36: #{tpu_custom_call.1} parent=1 // pred_region
      %vm73 = vcmask 261120
      %74 = vst.msk [vmem:[#allocation2] sm:$0xff] %vm73, 0.0
    $region37: #{tpu_custom_call.1} parent=1 // pred_fallthru
      _
    %v75 = vld [vmem:[#allocation2] sm:$0xff]
    %v76 = vld [vmem:[#allocation3] sm:$0xff]
    %v77 = vld [vmem:[#allocation3 + $0x8] sm:$0xff]
    %v78 = vld [vmem:[#allocation3 + $0x10] sm:$0xff]
    %v79 = vld [vmem:[#allocation3 + $0x18] sm:$0xff]
    %v80 = vld [vmem:[#allocation3 + $0x20] sm:$0xff]
    %v81 = vld [vmem:[#allocation3 + $0x28] sm:$0xff]
    %v82 = vld [vmem:[#allocation3 + $0x30] sm:$0xff]
    %v83 = vld [vmem:[#allocation3 + $0x38] sm:$0xff]
    %vm84 = vcmask 261120
    %v85 = vsel %vm84, %v76, 0.0
    %v86 = vrot.slane %v85, 4
    %v87 = vadd.f32 %v85, %v86
    %v88 = vrot.slane %v87, 2
    %v89 = vadd.f32 %v87, %v88
    %v90 = vrot.slane %v89, 1
    %v91 = vadd.f32 %v89, %v90
    %v92 = vsel %vm84, %v77, 0.0
    %v93 = vrot.slane %v92, 4
    %v94 = vadd.f32 %v92, %v93
    %v95 = vrot.slane %v94, 2
    %v96 = vadd.f32 %v94, %v95
    %v97 = vrot.slane %v96, 1
    %v98 = vadd.f32 %v96, %v97
    %v99 = vsel %vm84, %v78, 0.0
    %v100 = vrot.slane %v99, 4
    %v101 = vadd.f32 %v99, %v100
    %v102 = vrot.slane %v101, 2
    %v103 = vadd.f32 %v101, %v102
    %v104 = vrot.slane %v103, 1
    %v105 = vadd.f32 %v103, %v104
    %v106 = vsel %vm84, %v79, 0.0
    %v107 = vrot.slane %v106, 4
    %v108 = vadd.f32 %v106, %v107
    %v109 = vrot.slane %v108, 2
    %v110 = vadd.f32 %v108, %v109
    %v111 = vrot.slane %v110, 1
    %v112 = vadd.f32 %v110, %v111
    %v113 = vsel %vm84, %v80, 0.0
    %v114 = vrot.slane %v113, 4
    %v115 = vadd.f32 %v113, %v114
    %v116 = vrot.slane %v115, 2
    %v117 = vadd.f32 %v115, %v116
    %v118 = vrot.slane %v117, 1
    %v119 = vadd.f32 %v117, %v118
    %v120 = vsel %vm84, %v81, 0.0
    %v121 = vrot.slane %v120, 4
    %v122 = vadd.f32 %v120, %v121
    %v123 = vrot.slane %v122, 2
    %v124 = vadd.f32 %v122, %v123
    %v125 = vrot.slane %v124, 1
    %v126 = vadd.f32 %v124, %v125
    %v127 = vsel %vm84, %v82, 0.0
    %v128 = vrot.slane %v127, 4
    %v129 = vadd.f32 %v127, %v128
    %v130 = vrot.slane %v129, 2
    %v131 = vadd.f32 %v129, %v130
    %v132 = vrot.slane %v131, 1
    %v133 = vadd.f32 %v131, %v132
    %v134 = vsel %vm84, %v83, 0.0
    %v135 = vrot.slane %v134, 4
    %v136 = vadd.f32 %v134, %v135
    %v137 = vrot.slane %v136, 2
    %v138 = vadd.f32 %v136, %v137
    %v139 = vrot.slane %v138, 1
    %v140 = vadd.f32 %v138, %v139
    %vm149 = vcmask 1041409
    %v150 = vsel %vm149, %v98, %v91
    %vm151 = vcmask 1042434
    %v152 = vsel %vm151, %v105, %v150
    %vm153 = vcmask 1043459
    %v154 = vsel %vm153, %v112, %v152
    %vm155 = vcmask 1044484
    %v156 = vsel %vm155, %v119, %v154
    %vm157 = vcmask 1045509
    %v158 = vsel %vm157, %v126, %v156
    %vm159 = vcmask 1046534
    %v160 = vsel %vm159, %v133, %v158
    %vm161 = vcmask 1047559
    %v162 = vsel %vm161, %v140, %v160
    %v164 = vadd.f32 %v75, %v162
    %165 = vst.msk [vmem:[#allocation2] sm:$0xff] %vm84, %v164
    // Predicated region
    $region38: #{tpu_custom_call.1} parent=1 // pred_check
      %p166 = pneg %p69
    $region39: #{tpu_custom_call.1} parent=1 // pred_check_branch
      %168 = sbr.rel (%p166) target = $region41
    $region40: #{tpu_custom_call.1} parent=1 // pred_region
      %v169 = vld [vmem:[#allocation2] sm:$0xff]
      %v170 = vmul.f32 %v169, 0.125
      %v171 = vpack.c.bf16 %v170, %v170
      %v172 = vld [vmem:[#allocation6] sm:$0xf]
      %v173 = vld [vmem:[#allocation6 + $0x4] sm:$0xf]
      %v174 = vld [vmem:[#allocation6 + $0x8] sm:$0xf]
      %v175 = vld [vmem:[#allocation6 + $0xc] sm:$0xf]
      %v176 = vld [vmem:[%s2] sm:$0x1]
      %v178 = vperm.slane %v176, 0
      %v184 = vunpack.c.l.b16 %v172
      %v185 = vunpack.c.l.b16 %v173
      %v186 = vunpack.c.l.b16 %v174
      %v187 = vunpack.c.l.b16 %v175
      %v188 = vpack.c.b16 %v185, %v184
      %v189 = vpack.c.b16 %v187, %v186
      %v193 = vsel %vm84, %v171, 0
      %195 = vmatpush.bf16.msra.mxu0 0
      %196 = vmatpush.bf16.msra.mxu0 0
      %197 = vmatpush.bf16.msra.mxu0 0
      %198 = vmatpush.bf16.msra.mxu0 0
      %199 = vmatpush.bf16.msra.mxu0 0
      %200 = vmatpush.bf16.msra.mxu0 0
      %201 = vmatpush.bf16.msra.mxu0 %v189
      %202 = vmatpush.bf16.msra.mxu0 %v188
      %203 = vmatmul.bf16.gmra.mxu0 %v193
      %v204 = vpop.f32.mrf.mxu0
      %v205 = vadd.f32 %v178, %v204
      %v206 = vpop.f32.mrf.mxu0
      %207 = vdwg.mxu0
      %v208 = vpack.c.bf16 %v205, %v205
      %v209 = vld [vmem:[#allocation8] sm:$0xf]
      %v210 = vld [vmem:[#allocation8 + $0x4] sm:$0xf]
      %v211 = vld [vmem:[#allocation8 + $0x8] sm:$0xf]
      %v212 = vld [vmem:[#allocation8 + $0xc] sm:$0xf]
      %v213 = vld [vmem:[%s4] sm:$0x1]
      %v215 = vperm.slane %v213, 0
      %v221 = vunpack.c.l.b16 %v209
      %v222 = vunpack.c.l.b16 %v210
      %v223 = vunpack.c.l.b16 %v211
      %v224 = vunpack.c.l.b16 %v212
      %v225 = vpack.c.b16 %v222, %v221
      %v226 = vpack.c.b16 %v224, %v223
      %v230 = vsel %vm84, %v208, 0
      %232 = vmatpush.bf16.msra.mxu0 0
      %233 = vmatpush.bf16.msra.mxu0 0
      %234 = vmatpush.bf16.msra.mxu0 0
      %235 = vmatpush.bf16.msra.mxu0 0
      %236 = vmatpush.bf16.msra.mxu0 0
      %237 = vmatpush.bf16.msra.mxu0 0
      %238 = vmatpush.bf16.msra.mxu0 %v226
      %239 = vmatpush.bf16.msra.mxu0 %v225
      %240 = vmatmul.bf16.gmra.mxu0 %v230
      %v241 = vpop.f32.mrf.mxu0
      %v242 = vadd.f32 %v215, %v241
      %v243 = vpop.f32.mrf.mxu0
      %244 = vdwg.mxu0
      %245 = vst [vmem:[#allocation9] sm:$0xff] %v242
    $region41: #{tpu_custom_call.1} parent=1 // pred_fallthru
      _
    // Predicated region
    $region42: #{tpu_custom_call.1} parent=1 // pred_check
      _
    $region43: #{tpu_custom_call.1} parent=1 // pred_check_branch
      %247 = sbr.rel (0) target = $region45
    $region44: #{tpu_custom_call.1} parent=1 // pred_region
      %249 = vsyncadd [#allocation5], 0
      %s251 = sshll.u32 [#allocation9], 4
      %s252 = int_to_ptr.vmem [resolvable:$true] %s251
      %s253 = sshll.u32 %s5, 4
      %s254 = int_to_ptr.hbm [resolvable:$true] %s253
      %256 = dma.vmem_to_hbm [thread:$0]  %s252, 128, %s254, [#allocation5]
    $region45: #{tpu_custom_call.1} parent=1 // pred_fallthru
      _
    // Predicated region
    $region46: #{tpu_custom_call.1} parent=1 // pred_check
      _
    $region47: #{tpu_custom_call.1} parent=1 // pred_check_branch
      %258 = sbr.rel (0) target = $region49
    $region48: #{tpu_custom_call.1} parent=1 // pred_region
      %260 = dma.done [#allocation5], 128
    $region49: #{tpu_custom_call.1} parent=1 // pred_fallthru
      _
    %261 = vsyncpa [#allocation4], 1
    %262 = vsyncpa [#allocation7], 1
    %263 = vsyncpa [#allocation5], 1

</llo_original>
